<compile_context>
chip_gen: v5e
topology: v5e:2x2
jax: 0.10.0
libtpu: 0.0.40
codegen_flags: <defaults>
</compile_context>

<pallas_src>
import math

import jax
import jax.numpy as jnp
from jax.experimental import pallas as pl
from jax.experimental.pallas import tpu as pltpu


def _round_up(x, m):
    return ((x + m - 1) // m) * m


# ----------------------------------------------------------------------------
# Kernel 1: fused per-user bias (mean of non-zero ratings) + adjusted ratings.
#   adjusted[u, i] = rating[u, i] - mean_{i: rating[u,i] != 0} rating[u, i]
# Padded (all-zero) user rows produce bias 0 and adjusted 0.
# ----------------------------------------------------------------------------
def _adjusted_kernel(r_ref, adj_ref):
    r = r_ref[...]                                             # (TU, I) f32
    s = jnp.sum(r, axis=1, keepdims=True)                      # zeros add nothing
    c = jnp.sum((r != 0.0).astype(jnp.float32), axis=1, keepdims=True)
    bias = jnp.where(c > 0, s / jnp.maximum(c, 1.0), 0.0)      # safe divide
    adj_ref[...] = r - bias


def compute_adjusted_ratings(rating_pad):
    """rating_pad: (Upad, I) f32, Upad a multiple of 8.  Returns adjusted (Upad, I)."""
    Upad, I = rating_pad.shape
    tu = math.gcd(64, Upad)            # multiple of 8, divides Upad
    grid_spec = pltpu.PrefetchScalarGridSpec(
        num_scalar_prefetch=0,
        grid=(Upad // tu,),
        in_specs=[pl.BlockSpec((tu, I), lambda u: (u, 0))],
        out_specs=pl.BlockSpec((tu, I), lambda u: (u, 0)),
    )
    return pl.pallas_call(
        _adjusted_kernel,
        grid_spec=grid_spec,
        out_shape=jax.ShapeDtypeStruct((Upad, I), jnp.float32),
        compiler_params=pltpu.CompilerParams(
            dimension_semantics=("parallel",)),
    )(rating_pad.astype(jnp.float32))


# ----------------------------------------------------------------------------
# Kernel 2: batched CF scoring.
#   grid = (num_batch_blocks, num_user_blocks); user axis is the reduction.
#   sims_ref / adj_ref : (TUK, TB)  -- user on sublanes, batch on lanes
#   bias_ref / o_ref   : (1, TB)    -- lane-dense
# ----------------------------------------------------------------------------
def _cf_score_kernel(sims_ref, adj_ref, bias_ref, o_ref, acc_ref):
    k = pl.program_id(1)

    @pl.when(k == 0)
    def _():
        acc_ref[...] = jnp.zeros_like(acc_ref)

    # Upcast to f32 for the multiply/accumulate (mandatory on v5e for bf16 inputs).
    s = sims_ref[...].astype(jnp.float32)
    a = adj_ref[...].astype(jnp.float32)
    acc_ref[...] += jnp.sum(s * a, axis=0, keepdims=True)      # (1, TB) lane-dense

    @pl.when(k == pl.num_programs(1) - 1)
    def _():
        o_ref[...] = jax.nn.sigmoid(acc_ref[...] + bias_ref[...]) * 5.0


def cf_forward(params, user, item, rating_mtx, *, tb=128, tuk=256,
               compute_dtype=jnp.float32):
    """CF forward.  compute_dtype=jnp.bfloat16 halves HBM traffic for the two
    gathered slabs (f32 accumulation keeps precision)."""
    assert tb % 128 == 0 and tuk % 8 == 0
    U, I = rating_mtx.shape                     # U = n_users+1, I = n_items+1
    B = user.shape[0]
    Upad = _round_up(U, tuk)
    Bpad = _round_up(B, tb)
    nb, nk = Bpad // tb, Upad // tuk

    # Pad user rows; padded rows give bias 0 / adjusted 0 and never matter
    # because the corresponding similarity lanes are zero-padded too.
    r_pad = jnp.zeros((Upad, I), jnp.float32).at[:U].set(
        rating_mtx.astype(jnp.float32))

    # Fused Pallas kernel: adjusted = rating - per-user mean of non-zero ratings.
    adjusted = compute_adjusted_ratings(r_pad)                 # (Upad, I) f32

    # Pad indices to the batch tile (clamped to 0; padded scores sliced away).
    user_p = jnp.zeros((Bpad,), jnp.int32).at[:B].set(user.astype(jnp.int32))
    item_p = jnp.zeros((Bpad,), jnp.int32).at[:B].set(item.astype(jnp.int32))

    # Wrapper-side gathers -> dense slabs: user axis on sublanes, batch on lanes,
    # so the in-kernel reduction lands directly on a lane-dense (1, TB) row.
    sims = params["user_similarity"].astype(jnp.float32)
    sims_gT = jnp.zeros((Upad, Bpad), jnp.float32).at[:U].set(
        jnp.take(sims, user_p, axis=0).T)                      # (Upad, Bpad)
    adj_gT = jnp.take(adjusted, item_p, axis=1)                # (Upad, Bpad)
    sims_gT = sims_gT.astype(compute_dtype)
    adj_gT = adj_gT.astype(compute_dtype)

    # Per-pair bias precomputed outside the kernel (no SMEM tables needed).
    bias_b = (params["user_bias"].astype(jnp.float32)[user_p]
              + params["item_bias"].astype(jnp.float32)[item_p]
              + params["global_bias"].astype(jnp.float32))
    bias_b = bias_b.reshape(1, Bpad)

    grid_spec = pltpu.PrefetchScalarGridSpec(
        num_scalar_prefetch=0,
        grid=(nb, nk),                                         # reduction axis last
        in_specs=[
            pl.BlockSpec((tuk, tb), lambda b, k: (k, b)),      # similarities
            pl.BlockSpec((tuk, tb), lambda b, k: (k, b)),      # adjusted ratings
            pl.BlockSpec((1, tb), lambda b, k: (0, b)),        # per-pair bias
        ],
        out_specs=pl.BlockSpec((1, tb), lambda b, k: (0, b)),
        scratch_shapes=[pltpu.VMEM((1, tb), jnp.float32)],
    )

    out = pl.pallas_call(
        _cf_score_kernel,
        grid_spec=grid_spec,
        out_shape=jax.ShapeDtypeStruct((1, Bpad), jnp.float32),
        compiler_params=pltpu.CompilerParams(
            dimension_semantics=("parallel", "arbitrary")),    # batch blocks shard across TCs
    )(sims_gT, adj_gT, bias_b)
    return out[0, :B]


# ----------------------------------------------------------------------------
# Parameter init (mirrors CF.__init__) + pure-JAX reference for verification.
# ----------------------------------------------------------------------------
def init_cf_params(key, n_users, n_items, rating_mtx):
    # xavier_normal_ for a square (n_users+1, n_users+1) matrix.
    std = (2.0 / (2.0 * (n_users + 1))) ** 0.5
    sim = std * jax.random.normal(key, (n_users + 1, n_users + 1), jnp.float32)
    mask = rating_mtx > 0
    global_mean = (jnp.sum(jnp.where(mask, rating_mtx, 0.0)) /
                   jnp.sum(mask.astype(jnp.float32)))
    return dict(
        user_similarity=sim,
        user_bias=jnp.zeros((n_users + 1,), jnp.float32),
        item_bias=jnp.zeros((n_items + 1,), jnp.float32),
        global_bias=global_mean.astype(jnp.float32),
    )


def cf_forward_ref(params, user, item, rating_mtx):
    s = jnp.sum(rating_mtx, axis=1)
    c = jnp.sum((rating_mtx != 0).astype(jnp.float32), axis=1)
    ubf = jnp.where(c > 0, s / jnp.maximum(c, 1.0), 0.0)
    adjusted = rating_mtx - ubf[:, None]
    sims = params["user_similarity"][user]                # (B, U)
    item_ratings = adjusted[:, item]                      # (U, B)
    scores = jnp.sum(sims * item_ratings.T, axis=1)
    bias = (params["user_bias"][user] + params["item_bias"][item]
            + params["global_bias"])
    return jax.nn.sigmoid(scores + bias) * 5.0


if __name__ == "__main__":
    key = jax.random.PRNGKey(0)
    k_r, k_p, k_u, k_i = jax.random.split(key, 4)

    n_users, n_items, B = 8, 12, 8
    U, I = n_users + 1, n_items + 1

    # Integer ratings 0..5; 0 means "not rated".
    rating_mtx = jax.random.randint(k_r, (U, I), 0, 6).astype(jnp.float32)
    params = init_cf_params(k_p, n_users, n_items, rating_mtx)

    user = jax.random.randint(k_u, (B,), 0, U)
    item = jax.random.randint(k_i, (B,), 0, I)

    ref = cf_forward_ref(params, user, item, rating_mtx)

    # f32 path: strict check against the pure-JAX reference.
    out = cf_forward(params, user, item, rating_mtx)
    out = jax.block_until_ready(out)
    assert out.shape == (B,)
    assert bool(jnp.allclose(out, ref, atol=1e-5)), (out, ref)

    # bf16 DMA path (halved HBM traffic, f32 accumulation): loose check.
    out_bf16 = cf_forward(params, user, item, rating_mtx,
                          compute_dtype=jnp.bfloat16)
    out_bf16 = jax.block_until_ready(out_bf16)
    assert bool(jnp.allclose(out_bf16, ref, atol=5e-2)), (out_bf16, ref)

    print("KERNEL_OK")
</pallas_src>

<mosaic_0001>
module attributes {stable_mosaic.version = 11 : i64} {
  func.func @_adjusted_kernel(%arg0: i32, %arg1: memref<64x13xf32, #tpu.memory_space<vmem>>, %arg2: memref<64x13xf32, #tpu.memory_space<vmem>>) attributes {dimension_semantics = [#tpu.dimension_semantics<parallel>], iteration_bounds = array<i64: 4>, scalar_prefetch = 0 : i64, scratch_operands = 0 : i64, tpu.core_type = #tpu.core_type<tc>, window_params = [{transform_indices = @transform_0, window_bounds = array<i64: 64, 13>}, {transform_indices = @transform_1, window_bounds = array<i64: 64, 13>}]} {
    %c0 = arith.constant 0 : index
    %c0_0 = arith.constant 0 : index
    %0 = vector.load %arg1[%c0, %c0_0] : memref<64x13xf32, #tpu.memory_space<vmem>>, vector<64x13xf32>
    %cst = arith.constant dense<0.000000e+00> : vector<64xf32>
    %1 = vector.multi_reduction <add>, %0, %cst [1] : vector<64x13xf32> to vector<64xf32>
    %2 = vector.shape_cast %1 : vector<64xf32> to vector<64x1xf32>
    %cst_1 = arith.constant 0.000000e+00 : f32
    %3 = vector.broadcast %cst_1 : f32 to vector<64x13xf32>
    %4 = arith.cmpf one, %0, %3 : vector<64x13xf32>
    %5 = arith.extui %4 : vector<64x13xi1> to vector<64x13xi32>
    %6 = arith.sitofp %5 : vector<64x13xi32> to vector<64x13xf32>
    %cst_2 = arith.constant dense<0.000000e+00> : vector<64xf32>
    %7 = vector.multi_reduction <add>, %6, %cst_2 [1] : vector<64x13xf32> to vector<64xf32>
    %8 = vector.shape_cast %7 : vector<64xf32> to vector<64x1xf32>
    %cst_3 = arith.constant 0.000000e+00 : f32
    %9 = vector.broadcast %cst_3 : f32 to vector<64x1xf32>
    %10 = arith.cmpf ogt, %8, %9 : vector<64x1xf32>
    %cst_4 = arith.constant 1.000000e+00 : f32
    %11 = vector.broadcast %cst_4 : f32 to vector<64x1xf32>
    %12 = arith.maximumf %8, %11 : vector<64x1xf32>
    %13 = arith.divf %2, %12 : vector<64x1xf32>
    %cst_5 = arith.constant 0.000000e+00 : f32
    %14 = vector.broadcast %cst_5 : f32 to vector<64x1xf32>
    %15 = arith.select %10, %13, %14 : vector<64x1xi1>, vector<64x1xf32>
    %16 = vector.broadcast %15 : vector<64x1xf32> to vector<64x13xf32>
    %17 = arith.subf %0, %16 : vector<64x13xf32>
    %c0_6 = arith.constant 0 : index
    %c0_7 = arith.constant 0 : index
    %18 = vector.load %arg2[%c0_6, %c0_7] : memref<64x13xf32, #tpu.memory_space<vmem>>, vector<64x13xf32>
    tpu.vector_store %arg2[%c0_6, %c0_7], %17 {strides = array<i32>} : memref<64x13xf32, #tpu.memory_space<vmem>>, vector<64x13xf32>,
    return
  }
  func.func @transform_0(%arg0: i32) -> (i32, i32) {
    %c0_i32 = arith.constant 0 : i32
    %c0_i32_0 = arith.constant 0 : i32
    return %arg0, %c0_i32 : i32, i32
  }
  func.func @transform_1(%arg0: i32) -> (i32, i32) {
    %c0_i32 = arith.constant 0 : i32
    %c0_i32_0 = arith.constant 0 : i32
    return %arg0, %c0_i32 : i32, i32
  }
}

</mosaic_0001>

<llo_original>
// kernel: tpu_custom_call.1
$region0: #{tpu_custom_call.1}
  #allocation0 [shape = 'u32[]', space=smem, size = 0x4, offset = 0x4, fixed_abs, tag = 'smem constant byte address 0x4 - core index']
  #allocation1 [shape = 'u32[72,128]{1,0:T(1,128)}', space=vmem, size = 0x9000, scoped, tag = 'internal scratch']
  %s0 = inlined_call_operand.vmem [shape: f32[256,13], index: 0, kind: input, shape index: {}]
  %s1 = inlined_call_operand.vmem [shape: f32[256,13], index: 1, kind: output, shape index: {}]
  %s2 = sld [smem:[#allocation0]]
  $region37: #{tpu_custom_call.1} parent=0
    _
  %s4 = ssub.s32 1, %s2
  %s5 = scalar_select 0, %s4, %s2
  loop: start=0, step=1, limit=6
  $region2: #{tpu_custom_call.1} parent=0 // loop_pre_header
    _
  $region3: #{tpu_custom_call.1} parent=0 // loop_header
    %s7 = sphi 0, %s11
    %p8 = scmp.ge.s32.totalorder %s7, 6
    %s17 = sphi 0, %s19
    %s20 = sphi 0, %s17
    %s21 = sphi 0, %s20
    %s37 = sphi 0, %s21
    %s43 = sphi 0, %s45
    %s46 = sphi 0, %s43
    %s47 = sphi 0, %s46
    %s63 = sphi 0, %s47
  $region4: #{tpu_custom_call.1} parent=0 // loop_header_branch
    %10 = sbr.rel (%p8) target = $region8
  $region5: #{tpu_custom_call.1} parent=0 // loop_body
    %s12 = ssub.s32 %s7, 1
    %s13 = ssub.s32 %s7, 2
    %s14 = sadd.s32 %s7, 1
    %s15 = ssub.s32 %s7, %s14
    %p16 = scmp.eq.s32.totalorder %s15, 0
    %s18 = sadd.s32 %s17, 1
    %s19 = scalar_select %p16, %s17, %s18
    %p22 = pneg %p16
    %p23 = scmp.eq.s32.totalorder %s7, 3
    %p24 = por %p22, %p23
    %p25 = scmp.ne.s32.totalorder %s17, %s20
    %p26 = scmp.eq.s32.totalorder %s7, 0
    %p27 = por %p25, %p26
    %p28 = scmp.ne.s32.totalorder %s17, %s20
    %p29 = scmp.eq.s32.totalorder %s12, 3
    %p30 = por %p28, %p29
    %p31 = scmp.ne.s32.totalorder %s20, %s21
    %p32 = scmp.eq.s32.totalorder %s12, 0
    %p33 = por %p31, %p32
    %p34 = scmp.ne.s32.totalorder %s20, %s21
    %p35 = scmp.eq.s32.totalorder %s13, 3
    %p36 = por %p34, %p35
    %p38 = scmp.ne.s32.totalorder %s21, %s37
    %p39 = scmp.eq.s32.totalorder %s13, 0
    %p40 = por %p38, %p39
    %s41 = ssub.s32 %s7, %s14
    %p42 = scmp.eq.s32.totalorder %s41, 0
    %s44 = sadd.s32 %s43, 1
    %s45 = scalar_select %p42, %s43, %s44
    %p48 = pneg %p42
    %p49 = scmp.eq.s32.totalorder %s7, 3
    %p50 = por %p48, %p49
    %p51 = scmp.ne.s32.totalorder %s43, %s46
    %p52 = scmp.eq.s32.totalorder %s7, 0
    %p53 = por %p51, %p52
    %p54 = scmp.ne.s32.totalorder %s43, %s46
    %p55 = scmp.eq.s32.totalorder %s12, 3
    %p56 = por %p54, %p55
    %p57 = scmp.ne.s32.totalorder %s46, %s47
    %p58 = scmp.eq.s32.totalorder %s12, 0
    %p59 = por %p57, %p58
    %p60 = scmp.ne.s32.totalorder %s46, %s47
    %p61 = scmp.eq.s32.totalorder %s13, 3
    %p62 = por %p60, %p61
    %p64 = scmp.ne.s32.totalorder %s47, %s63
    %p65 = scmp.eq.s32.totalorder %s13, 0
    %p66 = por %p64, %p65
    %p67 = scmp.le.s32.totalorder 1, %s7
    %p68 = scmp.lt.s32.totalorder %s7, 5
    %p69 = pnand %p67, %p68
    %p70 = pneg %p69
    // Predicated region
    $region9: #{tpu_custom_call.1} parent=5 // pred_check
      _
    $region10: #{tpu_custom_call.1} parent=5 // pred_check_branch
      %72 = sbr.rel (%p69) target = $region12
    $region11: #{tpu_custom_call.1} parent=5 // pred_region
      %s73 = ssub.s32 %s7, 1
    $region12: #{tpu_custom_call.1} parent=5 // pred_fallthru
      _
    %p74 = scmp.lt.s32.totalorder %s7, 4
    // Predicated region
    $region13: #{tpu_custom_call.1} parent=5 // pred_check
      %p75 = pneg %p74
    $region14: #{tpu_custom_call.1} parent=5 // pred_check_branch
      %77 = sbr.rel (%p75) target = $region16
    $region15: #{tpu_custom_call.1} parent=5 // pred_region
      // Predicated region
      $region17: #{tpu_custom_call.1} parent=15 // pred_check
        %p78 = pneg %p27
      $region18: #{tpu_custom_call.1} parent=15 // pred_check_branch
        %80 = sbr.rel (%p78) target = $region20
      $region19: #{tpu_custom_call.1} parent=15 // pred_region
        %s81 = smul.u32 8, %s7
        %p82 = scmp.lt.s32.totalorder %s81, 31
        %s83 = scalar_select %p82, %s81, 31
        %s84 = smul.addr %s83, 8
        %s85 = scalar_lea.vmem %s0, %s84
        %s86 = smul.u32 8, %s7
      $region20: #{tpu_custom_call.1} parent=15 // pred_fallthru
        _
    $region16: #{tpu_custom_call.1} parent=5 // pred_fallthru
      _
    %p87 = scmp.le.s32.totalorder 1, %s7
    %p88 = scmp.lt.s32.totalorder %s7, 5
    %p89 = pnand %p87, %p88
    %p90 = pneg %p89
    // Predicated region
    $region21: #{tpu_custom_call.1} parent=5 // pred_check
      _
    $region22: #{tpu_custom_call.1} parent=5 // pred_check_branch
      %92 = sbr.rel (%p89) target = $region24
    $region23: #{tpu_custom_call.1} parent=5 // pred_region
      %s93 = ssub.s32 %s7, 1
      %s94 = smul.u32 8, %s12
      %p95 = scmp.lt.s32.totalorder %s94, 31
      %s96 = scalar_select %p95, %s94, 31
      %s97 = smul.addr %s96, 8
      %s98 = scalar_lea.vmem %s0, %s97
      %p99 = pneg %p33
      %p100 = pneg %p30
      %p101 = pneg %p59
      %p102 = pneg %p56
      %s103 = smul.u32 8, %s12
      %p104 = scmp.lt.s32.totalorder %s103, 31
      %s105 = scalar_select %p104, %s103, 31
      %s106 = smul.addr %s105, 8
      %s107 = scalar_lea.vmem %s1, %s106
      %s108 = smul.u32 8, %s12
      %p109 = scmp.lt.s32.totalorder %s108, 31
      %s110 = scalar_select %p109, %s108, 31
      %s111 = smul.addr %s110, 8
      %s112 = scalar_lea.vmem %s0, %s111
      %s113 = smul.u32 8, %s12
      %s114 = smul.u32 8, %s12
      %p115 = scmp.lt.s32.totalorder %s114, 31
      %s116 = scalar_select %p115, %s114, 31
      %s117 = smul.addr %s116, 8
      %s118 = scalar_lea.vmem %s1, %s117
      %s119 = smul.u32 8, %s12
      %v120 = vld [vmem:[%s112] sm:$0xff]
      %v121 = vld [vmem:[%s112 + $0x8] sm:$0xff]
      %v122 = vld [vmem:[%s112 + $0x10] sm:$0xff]
      %v123 = vld [vmem:[%s112 + $0x18] sm:$0xff]
      %v124 = vld [vmem:[%s112 + $0x20] sm:$0xff]
      %v125 = vld [vmem:[%s112 + $0x28] sm:$0xff]
      %v126 = vld [vmem:[%s112 + $0x30] sm:$0xff]
      %v127 = vld [vmem:[%s112 + $0x38] sm:$0xff]
      %vm128 = vcmask 105472
      %v129 = vsel %vm128, %v120, 0.0
      %130 = vadd.xlane.f32.xlu0 %v129
      %v131 = vpop.xlane.xlu0 %130
      %v132 = vsel %vm128, %v121, 0.0
      %133 = vadd.xlane.f32.xlu0 %v132
      %v134 = vpop.xlane.xlu0 %133
      %v135 = vsel %vm128, %v122, 0.0
      %136 = vadd.xlane.f32.xlu0 %v135
      %v137 = vpop.xlane.xlu0 %136
      %v138 = vsel %vm128, %v123, 0.0
      %139 = vadd.xlane.f32.xlu0 %v138
      %v140 = vpop.xlane.xlu0 %139
      %v141 = vsel %vm128, %v124, 0.0
      %142 = vadd.xlane.f32.xlu0 %v141
      %v143 = vpop.xlane.xlu0 %142
      %v144 = vsel %vm128, %v125, 0.0
      %145 = vadd.xlane.f32.xlu0 %v144
      %v146 = vpop.xlane.xlu0 %145
      %v147 = vsel %vm128, %v126, 0.0
      %148 = vadd.xlane.f32.xlu0 %v147
      %v149 = vpop.xlane.xlu0 %148
      %v150 = vsel %vm128, %v127, 0.0
      %151 = vadd.xlane.f32.xlu0 %v150
      %v152 = vpop.xlane.xlu0 %151
      %vm153 = vcmp.ne.f32.partialorder %v120, 0.0
      %vm154 = vcmp.ne.f32.partialorder %v121, 0.0
      %vm155 = vcmp.ne.f32.partialorder %v122, 0.0
      %vm156 = vcmp.ne.f32.partialorder %v123, 0.0
      %vm157 = vcmp.ne.f32.partialorder %v124, 0.0
      %vm158 = vcmp.ne.f32.partialorder %v125, 0.0
      %vm159 = vcmp.ne.f32.partialorder %v126, 0.0
      %vm160 = vcmp.ne.f32.partialorder %v127, 0.0
      %v161 = vsel %vm153, 1, 0
      %v162 = vsel %vm154, 1, 0
      %v163 = vsel %vm155, 1, 0
      %v164 = vsel %vm156, 1, 0
      %v165 = vsel %vm157, 1, 0
      %v166 = vsel %vm158, 1, 0
      %v167 = vsel %vm159, 1, 0
      %v168 = vsel %vm160, 1, 0
      %v169 = vcvt.s32.f32 %v161
      %v170 = vcvt.s32.f32 %v162
      %v171 = vcvt.s32.f32 %v163
      %v172 = vcvt.s32.f32 %v164
      %v173 = vcvt.s32.f32 %v165
      %v174 = vcvt.s32.f32 %v166
      %v175 = vcvt.s32.f32 %v167
      %v176 = vcvt.s32.f32 %v168
      %v177 = vsel %vm128, %v169, 0.0
      %178 = vadd.xlane.f32.xlu0 %v177
      %v179 = vpop.xlane.xlu0 %178
      %v180 = vsel %vm128, %v170, 0.0
      %181 = vadd.xlane.f32.xlu0 %v180
      %v182 = vpop.xlane.xlu0 %181
      %v183 = vsel %vm128, %v171, 0.0
      %184 = vadd.xlane.f32.xlu0 %v183
      %v185 = vpop.xlane.xlu0 %184
      %v186 = vsel %vm128, %v172, 0.0
      %187 = vadd.xlane.f32.xlu0 %v186
      %v188 = vpop.xlane.xlu0 %187
      %v189 = vsel %vm128, %v173, 0.0
      %190 = vadd.xlane.f32.xlu0 %v189
      %v191 = vpop.xlane.xlu0 %190
      %v192 = vsel %vm128, %v174, 0.0
      %193 = vadd.xlane.f32.xlu0 %v192
      %v194 = vpop.xlane.xlu0 %193
      %v195 = vsel %vm128, %v175, 0.0
      %196 = vadd.xlane.f32.xlu0 %v195
      %v197 = vpop.xlane.xlu0 %196
      %v198 = vsel %vm128, %v176, 0.0
      %199 = vadd.xlane.f32.xlu0 %v198
      %v200 = vpop.xlane.xlu0 %199
      %vm201 = vcmp.gt.f32.partialorder %v179, 0.0
      %vm202 = vcmp.gt.f32.partialorder %v182, 0.0
      %vm203 = vcmp.gt.f32.partialorder %v185, 0.0
      %vm204 = vcmp.gt.f32.partialorder %v188, 0.0
      %vm205 = vcmp.gt.f32.partialorder %v191, 0.0
      %vm206 = vcmp.gt.f32.partialorder %v194, 0.0
      %vm207 = vcmp.gt.f32.partialorder %v197, 0.0
      %vm208 = vcmp.gt.f32.partialorder %v200, 0.0
      %v209 = vmax.f32 %v179, 1.0
      %v210 = vmax.f32 %v182, 1.0
      %v211 = vmax.f32 %v185, 1.0
      %v212 = vmax.f32 %v188, 1.0
      %v213 = vmax.f32 %v191, 1.0
      %v214 = vmax.f32 %v194, 1.0
      %v215 = vmax.f32 %v197, 1.0
      %v216 = vmax.f32 %v200, 1.0
      %v217 = vrcp.pop %v209
      %v218 = vmul.f32 %v209, %v217
      %v219 = vsub.f32 1.0, %v218
      %v220 = vmul.f32 %v217, %v219
      %v221 = vadd.f32 %v217, %v220
      %vm222 = vweird.f32 %v209
      %vm223 = vweird.f32 %v217
      %vm224 = vmor %vm222, %vm223
      %v225 = vsel %vm224, %v217, %v221
      %v226 = vand.u32 2147483647, %v209
      %vm227 = vcmp.eq.f32.partialorder %v226, 8.507059e+37
      %v228 = vand.u32 %v209, 2147483648
      %v229 = vor.u32 1.1754944e-38, %v228
      %v230 = vsel %vm227, %v229, %v225
      %v231 = vmul.f32 %v131, %v230
      %v232 = vrcp.pop %v210
      %v233 = vmul.f32 %v210, %v232
      %v234 = vsub.f32 1.0, %v233
      %v235 = vmul.f32 %v232, %v234
      %v236 = vadd.f32 %v232, %v235
      %vm237 = vweird.f32 %v210
      %vm238 = vweird.f32 %v232
      %vm239 = vmor %vm237, %vm238
      %v240 = vsel %vm239, %v232, %v236
      %v241 = vand.u32 2147483647, %v210
      %vm242 = vcmp.eq.f32.partialorder %v241, 8.507059e+37
      %v243 = vand.u32 %v210, 2147483648
      %v244 = vor.u32 1.1754944e-38, %v243
      %v245 = vsel %vm242, %v244, %v240
      %v246 = vmul.f32 %v134, %v245
      %v247 = vrcp.pop %v211
      %v248 = vmul.f32 %v211, %v247
      %v249 = vsub.f32 1.0, %v248
      %v250 = vmul.f32 %v247, %v249
      %v251 = vadd.f32 %v247, %v250
      %vm252 = vweird.f32 %v211
      %vm253 = vweird.f32 %v247
      %vm254 = vmor %vm252, %vm253
      %v255 = vsel %vm254, %v247, %v251
      %v256 = vand.u32 2147483647, %v211
      %vm257 = vcmp.eq.f32.partialorder %v256, 8.507059e+37
      %v258 = vand.u32 %v211, 2147483648
      %v259 = vor.u32 1.1754944e-38, %v258
      %v260 = vsel %vm257, %v259, %v255
      %v261 = vmul.f32 %v137, %v260
      %v262 = vrcp.pop %v212
      %v263 = vmul.f32 %v212, %v262
      %v264 = vsub.f32 1.0, %v263
      %v265 = vmul.f32 %v262, %v264
      %v266 = vadd.f32 %v262, %v265
      %vm267 = vweird.f32 %v212
      %vm268 = vweird.f32 %v262
      %vm269 = vmor %vm267, %vm268
      %v270 = vsel %vm269, %v262, %v266
      %v271 = vand.u32 2147483647, %v212
      %vm272 = vcmp.eq.f32.partialorder %v271, 8.507059e+37
      %v273 = vand.u32 %v212, 2147483648
      %v274 = vor.u32 1.1754944e-38, %v273
      %v275 = vsel %vm272, %v274, %v270
      %v276 = vmul.f32 %v140, %v275
      %v277 = vrcp.pop %v213
      %v278 = vmul.f32 %v213, %v277
      %v279 = vsub.f32 1.0, %v278
      %v280 = vmul.f32 %v277, %v279
      %v281 = vadd.f32 %v277, %v280
      %vm282 = vweird.f32 %v213
      %vm283 = vweird.f32 %v277
      %vm284 = vmor %vm282, %vm283
      %v285 = vsel %vm284, %v277, %v281
      %v286 = vand.u32 2147483647, %v213
      %vm287 = vcmp.eq.f32.partialorder %v286, 8.507059e+37
      %v288 = vand.u32 %v213, 2147483648
      %v289 = vor.u32 1.1754944e-38, %v288
      %v290 = vsel %vm287, %v289, %v285
      %v291 = vmul.f32 %v143, %v290
      %v292 = vrcp.pop %v214
      %v293 = vmul.f32 %v214, %v292
      %v294 = vsub.f32 1.0, %v293
      %v295 = vmul.f32 %v292, %v294
      %v296 = vadd.f32 %v292, %v295
      %vm297 = vweird.f32 %v214
      %vm298 = vweird.f32 %v292
      %vm299 = vmor %vm297, %vm298
      %v300 = vsel %vm299, %v292, %v296
      %v301 = vand.u32 2147483647, %v214
      %vm302 = vcmp.eq.f32.partialorder %v301, 8.507059e+37
      %v303 = vand.u32 %v214, 2147483648
      %v304 = vor.u32 1.1754944e-38, %v303
      %v305 = vsel %vm302, %v304, %v300
      %v306 = vmul.f32 %v146, %v305
      %v307 = vrcp.pop %v215
      %v308 = vmul.f32 %v215, %v307
      %v309 = vsub.f32 1.0, %v308
      %v310 = vmul.f32 %v307, %v309
      %v311 = vadd.f32 %v307, %v310
      %vm312 = vweird.f32 %v215
      %vm313 = vweird.f32 %v307
      %vm314 = vmor %vm312, %vm313
      %v315 = vsel %vm314, %v307, %v311
      %v316 = vand.u32 2147483647, %v215
      %vm317 = vcmp.eq.f32.partialorder %v316, 8.507059e+37
      %v318 = vand.u32 %v215, 2147483648
      %v319 = vor.u32 1.1754944e-38, %v318
      %v320 = vsel %vm317, %v319, %v315
      %v321 = vmul.f32 %v149, %v320
      %v322 = vrcp.pop %v216
      %v323 = vmul.f32 %v216, %v322
      %v324 = vsub.f32 1.0, %v323
      %v325 = vmul.f32 %v322, %v324
      %v326 = vadd.f32 %v322, %v325
      %vm327 = vweird.f32 %v216
      %vm328 = vweird.f32 %v322
      %vm329 = vmor %vm327, %vm328
      %v330 = vsel %vm329, %v322, %v326
      %v331 = vand.u32 2147483647, %v216
      %vm332 = vcmp.eq.f32.partialorder %v331, 8.507059e+37
      %v333 = vand.u32 %v216, 2147483648
      %v334 = vor.u32 1.1754944e-38, %v333
      %v335 = vsel %vm332, %v334, %v330
      %v336 = vmul.f32 %v152, %v335
      %v337 = vsel %vm201, %v231, 0.0
      %v338 = vsel %vm202, %v246, 0.0
      %v339 = vsel %vm203, %v261, 0.0
      %v340 = vsel %vm204, %v276, 0.0
      %v341 = vsel %vm205, %v291, 0.0
      %v342 = vsel %vm206, %v306, 0.0
      %v343 = vsel %vm207, %v321, 0.0
      %v344 = vsel %vm208, %v336, 0.0
      %v345 = vsub.f32 %v120, %v337
      %v346 = vsub.f32 %v121, %v338
      %v347 = vsub.f32 %v122, %v339
      %v348 = vsub.f32 %v123, %v340
      %v349 = vsub.f32 %v124, %v341
      %v350 = vsub.f32 %v125, %v342
      %v351 = vsub.f32 %v126, %v343
      %v352 = vsub.f32 %v127, %v344
      %353 = vst.msk [vmem:[%s118] sm:$0xff] %vm128, %v345
      %354 = vst.msk [vmem:[%s118 + $0x8] sm:$0xff] %vm128, %v346
      %355 = vst.msk [vmem:[%s118 + $0x10] sm:$0xff] %vm128, %v347
      %356 = vst.msk [vmem:[%s118 + $0x18] sm:$0xff] %vm128, %v348
      %357 = vst.msk [vmem:[%s118 + $0x20] sm:$0xff] %vm128, %v349
      %358 = vst.msk [vmem:[%s118 + $0x28] sm:$0xff] %vm128, %v350
      %359 = vst.msk [vmem:[%s118 + $0x30] sm:$0xff] %vm128, %v351
      %360 = vst.msk [vmem:[%s118 + $0x38] sm:$0xff] %vm128, %v352
      %s361 = smul.u32 8, %s12
      %p362 = scmp.lt.s32.totalorder %s361, 31
      %s363 = scalar_select %p362, %s361, 31
      %s364 = smul.addr %s363, 8
      %s365 = scalar_lea.vmem %s1, %s364
      // Predicated region
      $region25: #{tpu_custom_call.1} parent=23 // pred_check
        %p366 = pneg %p56
      $region26: #{tpu_custom_call.1} parent=23 // pred_check_branch
        %368 = sbr.rel (%p366) target = $region28
      $region27: #{tpu_custom_call.1} parent=23 // pred_region
        %s369 = smul.u32 8, %s12
      $region28: #{tpu_custom_call.1} parent=23 // pred_fallthru
        _
    $region24: #{tpu_custom_call.1} parent=5 // pred_fallthru
      _
    %p370 = scmp.le.s32.totalorder 2, %s7
    // Predicated region
    $region29: #{tpu_custom_call.1} parent=5 // pred_check
      %p371 = pneg %p370
    $region30: #{tpu_custom_call.1} parent=5 // pred_check_branch
      %373 = sbr.rel (%p371) target = $region32
    $region31: #{tpu_custom_call.1} parent=5 // pred_region
      %s374 = ssub.s32 %s7, 2
      // Predicated region
      $region33: #{tpu_custom_call.1} parent=31 // pred_check
        %p375 = pneg %p62
      $region34: #{tpu_custom_call.1} parent=31 // pred_check_branch
        %377 = sbr.rel (%p375) target = $region36
      $region35: #{tpu_custom_call.1} parent=31 // pred_region
        %s378 = smul.u32 8, %s13
        %p379 = scmp.lt.s32.totalorder %s378, 31
        %s380 = scalar_select %p379, %s378, 31
        %s381 = smul.addr %s380, 8
        %s382 = scalar_lea.vmem %s1, %s381
      $region36: #{tpu_custom_call.1} parent=31 // pred_fallthru
        _
    $region32: #{tpu_custom_call.1} parent=5 // pred_fallthru
      _
  $region6: #{tpu_custom_call.1} parent=0 // loop_footer
    %s11 = sadd.s32 1, %s7
  $region7: #{tpu_custom_call.1} parent=0 // loop_footer_branch
    %6 = sbr.rel target = $region3
  $region8: #{tpu_custom_call.1} parent=0 // loop_exit
    _

</llo_original>
